<compile_context>
chip_gen: v5e
topology: v5e:2x2
jax: 0.10.0
libtpu: 0.0.40
codegen_flags: <defaults>
</compile_context>

<pallas_src>
import functools
import math

import jax
import jax.numpy as jnp
from jax.experimental import pallas as pl
from jax.experimental.pallas import tpu as pltpu


_TM_CAP = 512                      # M tile cap (sublane-aligned)
_TN_CAP = 512                      # N tile cap (lane-dense, multiple of 256)
_TK_CAP = 2048                     # K tile cap
_VMEM_BUDGET = 24 * 1024 * 1024    # operand budget, under every gen's scoped limit
_VMEM_LIMIT = 32 * 1024 * 1024     # raise v5e's 16 MiB default; safe on v6e/v7x


def _round_up(x, m):
    return ((x + m - 1) // m) * m


def _choose_nk_tiles(N, K):
    """Pick lane-dense N tile and the largest K tile that fits the VMEM budget."""
    tn = min(_TN_CAP, _round_up(N, 128))
    k_full = _round_up(K, 128)
    # Double-buffered x (tm, tk) + W^T (tk, tn) tiles plus a double-buffered
    # f32 output tile, assuming the worst-case (largest) M tile.
    fixed = 2 * _TM_CAP * tn * 4
    per_k = 2 * (_TM_CAP + tn) * 4
    tk_max = max(128, ((_VMEM_BUDGET - fixed) // per_k) // 128 * 128)
    tk = min(k_full, tk_max, _TK_CAP)
    return tn, tk


# ---------------------------------------------------------------------------
# Kernels
# ---------------------------------------------------------------------------

def _fc_kernel(x_ref, wt_ref, b_ref, o_ref):
    # x_ref: (tm, tk)  wt_ref: (tk, tn)  b_ref: (1, tn)  o_ref: (tm, tn) f32
    # The output block is resident across the K grid axis -> accumulate into it
    # directly (no scratch accumulator needed for an f32 output).
    k = pl.program_id(2)

    @pl.when(k == 0)
    def _():
        o_ref[...] = jnp.zeros_like(o_ref)

    o_ref[...] += jnp.dot(
        x_ref[...], wt_ref[...], preferred_element_type=jnp.float32
    )

    @pl.when(k == pl.num_programs(2) - 1)
    def _():
        o_ref[...] += b_ref[...]


def _fc_kernel_single_k(x_ref, wt_ref, b_ref, o_ref):
    # Whole K fits one tile: no init/epilogue branches at all.
    o_ref[...] = (
        jnp.dot(x_ref[...], wt_ref[...], preferred_element_type=jnp.float32)
        + b_ref[...]
    )


# ---------------------------------------------------------------------------
# One-time parameter preparation (hoisted out of the per-call hot path)
# ---------------------------------------------------------------------------

def prepare_fc_params(weight, bias):
    """Transpose + pad the Linear parameters once.

    weight: (out_ch, in_ch), bias: (out_ch,).
    Returns (wt_padded (K_pad, N_pad), bias2d (1, N_pad), cfg dict).
    """
    N, K = weight.shape
    tn, tk = _choose_nk_tiles(N, K)
    N_pad = _round_up(N, tn)
    K_pad = _round_up(K, tk)

    wt = weight.T  # (K, N) — done once, amortized over all forward calls
    if (K_pad, N_pad) != (K, N):
        wt = jnp.pad(wt, ((0, K_pad - K), (0, N_pad - N)))
    b = bias if N_pad == N else jnp.pad(bias, (0, N_pad - N))
    b2d = b.reshape(1, N_pad)
    return wt, b2d, {"tn": tn, "tk": tk}


# ---------------------------------------------------------------------------
# Forward
# ---------------------------------------------------------------------------

@functools.partial(jax.jit, static_argnames=("out_ch", "tn", "tk"))
def fc_forward(x, wt_p, b2d, *, out_ch, tn, tk):
    """x: (B, in_ch) f32; wt_p: (K_pad, N_pad) f32; b2d: (1, N_pad) f32."""
    M, K = x.shape
    K_pad, N_pad = wt_p.shape

    tm = min(_TM_CAP, _round_up(M, 8))
    M_pad = _round_up(M, tm)

    # Only the activations are padded per call (zeros contribute nothing).
    if (M_pad, K_pad) != (M, K):
        x_p = jnp.pad(x, ((0, M_pad - M), (0, K_pad - K)))
    else:
        x_p = x

    nm, nn_, nk = M_pad // tm, N_pad // tn, K_pad // tk
    grid = (nm, nn_, nk)
    kernel = _fc_kernel_single_k if nk == 1 else _fc_kernel

    # HBM bytes including re-reads: x is streamed once per N block, W once per
    # M block, plus the output write and the (tiny) bias re-reads.
    cost = pl.CostEstimate(
        flops=2 * M_pad * K_pad * N_pad,
        transcendentals=0,
        bytes_accessed=4 * (
            M_pad * K_pad * nn_
            + K_pad * N_pad * nm
            + M_pad * N_pad
            + N_pad * nm
        ),
    )

    out_p = pl.pallas_call(
        kernel,
        out_shape=jax.ShapeDtypeStruct((M_pad, N_pad), jnp.float32),
        grid=grid,
        in_specs=[
            pl.BlockSpec((tm, tk), lambda i, j, k: (i, k)),   # x tile
            pl.BlockSpec((tk, tn), lambda i, j, k: (k, j)),   # W^T tile (K, N)
            pl.BlockSpec((1, tn), lambda i, j, k: (0, j)),    # bias tile
        ],
        out_specs=pl.BlockSpec((tm, tn), lambda i, j, k: (i, j)),
        compiler_params=pltpu.CompilerParams(
            dimension_semantics=("parallel", "parallel", "arbitrary"),
            vmem_limit_bytes=_VMEM_LIMIT,
        ),
        cost_estimate=cost,
    )(x_p, wt_p, b2d)

    return out_p[:M, :out_ch]


# ---------------------------------------------------------------------------
# Init (mirrors FC.reset_parameters)
# ---------------------------------------------------------------------------

def init_fc_params(key, in_ch, out_ch):
    # nn.init.xavier_uniform_(weight): U(-a, a), a = sqrt(6/(fan_in+fan_out));
    # nn.init.zeros_(bias).
    a = math.sqrt(6.0 / (in_ch + out_ch))
    weight = jax.random.uniform(key, (out_ch, in_ch), jnp.float32, -a, a)
    bias = jnp.zeros((out_ch,), jnp.float32)
    return weight, bias


if __name__ == "__main__":
    in_ch, out_ch, batch = 32, 16, 8

    key = jax.random.PRNGKey(0)
    k_w, k_x = jax.random.split(key)

    weight, bias = init_fc_params(k_w, in_ch, out_ch)
    x = jax.random.normal(k_x, (batch, in_ch), jnp.float32)

    # One-time parameter prep (transpose + pad), then the jitted forward.
    wt_p, b2d, cfg = prepare_fc_params(weight, bias)
    y = fc_forward(x, wt_p, b2d, out_ch=out_ch, tn=cfg["tn"], tk=cfg["tk"])
    y = jax.block_until_ready(y)

    # Sanity check against plain-JAX reference of nn.Linear semantics.
    y_ref = x @ weight.T + bias
    assert y.shape == (batch, out_ch)
    assert jnp.allclose(y, y_ref, atol=1e-5, rtol=1e-5)

    print("KERNEL_OK")
</pallas_src>

<mosaic_0001>
module attributes {stable_mosaic.version = 11 : i64} {
  func.func @_fc_kernel_single_k(%arg0: i32, %arg1: i32, %arg2: i32, %arg3: memref<8x128xf32, #tpu.memory_space<vmem>>, %arg4: memref<128x128xf32, #tpu.memory_space<vmem>>, %arg5: memref<1x128xf32, #tpu.memory_space<vmem>>, %arg6: memref<8x128xf32, #tpu.memory_space<vmem>>) attributes {dimension_semantics = [#tpu.dimension_semantics<parallel>, #tpu.dimension_semantics<parallel>, #tpu.dimension_semantics<arbitrary>], iteration_bounds = array<i64: 1, 1, 1>, scalar_prefetch = 0 : i64, scratch_operands = 0 : i64, tpu.core_type = #tpu.core_type<tc>, window_params = [{transform_indices = @transform_0, window_bounds = array<i64: 8, 128>}, {transform_indices = @transform_1, window_bounds = array<i64: 128, 128>}, {transform_indices = @transform_2, window_bounds = array<i64: 1, 128>}, {transform_indices = @transform_3, window_bounds = array<i64: 8, 128>}]} {
    %c0 = arith.constant 0 : index
    %c0_0 = arith.constant 0 : index
    %0 = vector.load %arg3[%c0, %c0_0] : memref<8x128xf32, #tpu.memory_space<vmem>>, vector<8x128xf32>
    %c0_1 = arith.constant 0 : index
    %c0_2 = arith.constant 0 : index
    %1 = vector.load %arg4[%c0_1, %c0_2] : memref<128x128xf32, #tpu.memory_space<vmem>>, vector<128x128xf32>
    %cst = arith.constant dense<0.000000e+00> : vector<8x128xf32>
    %2 = tpu.matmul %0, %1, %cst {dimension_numbers = #tpu.dot_dimension_numbers<[1], [0], [0], [1], [0, 0, 1, 1], [], []>} : vector<8x128xf32>, vector<128x128xf32>, vector<8x128xf32> -> vector<8x128xf32>
    %c0_3 = arith.constant 0 : index
    %c0_4 = arith.constant 0 : index
    %3 = vector.load %arg5[%c0_3, %c0_4] : memref<1x128xf32, #tpu.memory_space<vmem>>, vector<1x128xf32>
    %4 = vector.broadcast %3 : vector<1x128xf32> to vector<8x128xf32>
    %5 = arith.addf %2, %4 : vector<8x128xf32>
    %c0_5 = arith.constant 0 : index
    %c0_6 = arith.constant 0 : index
    %6 = vector.load %arg6[%c0_5, %c0_6] : memref<8x128xf32, #tpu.memory_space<vmem>>, vector<8x128xf32>
    tpu.vector_store %arg6[%c0_5, %c0_6], %5 {strides = array<i32>} : memref<8x128xf32, #tpu.memory_space<vmem>>, vector<8x128xf32>,
    return
  }
  func.func @transform_0(%arg0: i32, %arg1: i32, %arg2: i32) -> (i32, i32) {
    %c0_i32 = arith.constant 0 : i32
    return %arg0, %arg2 : i32, i32
  }
  func.func @transform_1(%arg0: i32, %arg1: i32, %arg2: i32) -> (i32, i32) {
    %c0_i32 = arith.constant 0 : i32
    return %arg2, %arg1 : i32, i32
  }
  func.func @transform_2(%arg0: i32, %arg1: i32, %arg2: i32) -> (i32, i32) {
    %c0_i32 = arith.constant 0 : i32
    %c0_i32_0 = arith.constant 0 : i32
    return %c0_i32, %arg1 : i32, i32
  }
  func.func @transform_3(%arg0: i32, %arg1: i32, %arg2: i32) -> (i32, i32) {
    %c0_i32 = arith.constant 0 : i32
    return %arg0, %arg1 : i32, i32
  }
}

</mosaic_0001>

<llo_original>
// kernel: fc_forward.1
$region0: #{fc_forward.1}
  #allocation0 [shape = 'u32[]', space=smem, size = 0x4, offset = 0x4, fixed_abs, tag = 'smem constant byte address 0x4 - core index']
  #allocation1 [shape = 'u32[72,128]{1,0:T(1,128)}', space=vmem, size = 0x9000, scoped, tag = 'internal scratch']
  %s0 = inlined_call_operand.vmem [shape: f32[8,128], index: 0, kind: input, shape index: {}]
  %s1 = inlined_call_operand.hbm [shape: f32[128,128], index: 1, kind: input, shape index: {}]
  %s2 = inlined_call_operand.vmem [shape: f32[1,128], index: 2, kind: input, shape index: {}]
  %s3 = inlined_call_operand.hbm [shape: f32[8,128], index: 3, kind: output, shape index: {}]
  %s4 = sld [smem:[#allocation0]]
  $region26: #{fc_forward.1} parent=0
    _
  %s6 = ssub.s32 1, %s4
  %s7 = scalar_select 0, %s6, %s4
  $region1: #{fc_forward.1} parent=0
    #allocation2 [shape = 'u8[65536]{0}', space=vmem, size = 0x10000, scoped, tag = 'input window, operand 1, single buffered']
    #allocation3 [shape = 's32[1]{0}', space=sflag, size = 0x4, scoped, tag = 'scoped memory for fc_forward.1']
    #allocation4 [shape = 's32[1]{0}', space=sflag, size = 0x4, scoped, tag = 'scoped memory for fc_forward.1']
    #allocation5 [shape = 'u8[4096]{0}', space=vmem, size = 0x1000, scoped, tag = 'output window, operand 0, single buffered']
    %8 = vsyncpa [#allocation3], 0
    %9 = vsyncpa [#allocation4], 0
    // Predicated region
    $region2: #{fc_forward.1} parent=1 // pred_check
      _
    $region3: #{fc_forward.1} parent=1 // pred_check_branch
      %11 = sbr.rel (0) target = $region5
    $region4: #{fc_forward.1} parent=1 // pred_region
      _
    $region5: #{fc_forward.1} parent=1 // pred_fallthru
      _
    // Predicated region
    $region6: #{fc_forward.1} parent=1 // pred_check
      _
    $region7: #{fc_forward.1} parent=1 // pred_check_branch
      %13 = sbr.rel (0) target = $region9
    $region8: #{fc_forward.1} parent=1 // pred_region
      %15 = vsyncadd [#allocation3], 0
      %s16 = sshll.u32 %s1, 4
      %s17 = int_to_ptr.hbm [resolvable:$true] %s16
      %s18 = sshll.u32 [#allocation2], 4
      %s19 = int_to_ptr.vmem [resolvable:$true] %s18
      %24 = dma.hbm_to_vmem [thread:$0]  %s17, 2048, %s19, [#allocation3], 128, 128, 8
    $region9: #{fc_forward.1} parent=1 // pred_fallthru
      _
    // Predicated region
    $region10: #{fc_forward.1} parent=1 // pred_check
      _
    $region11: #{fc_forward.1} parent=1 // pred_check_branch
      %26 = sbr.rel (0) target = $region13
    $region12: #{fc_forward.1} parent=1 // pred_region
      _
    $region13: #{fc_forward.1} parent=1 // pred_fallthru
      _
    // Predicated region
    $region14: #{fc_forward.1} parent=1 // pred_check
      _
    $region15: #{fc_forward.1} parent=1 // pred_check_branch
      %28 = sbr.rel (0) target = $region17
    $region16: #{fc_forward.1} parent=1 // pred_region
      %30 = dma.done [#allocation3], 2048
    $region17: #{fc_forward.1} parent=1 // pred_fallthru
      _
    %v31 = vld [vmem:[%s0] sm:$0xff]
    %v32 = vld [vmem:[#allocation2] sm:$0xff]
    %v33 = vld [vmem:[#allocation2 + $0x8] sm:$0xff]
    %v34 = vld [vmem:[#allocation2 + $0x10] sm:$0xff]
    %v35 = vld [vmem:[#allocation2 + $0x18] sm:$0xff]
    %v36 = vld [vmem:[#allocation2 + $0x20] sm:$0xff]
    %v37 = vld [vmem:[#allocation2 + $0x28] sm:$0xff]
    %v38 = vld [vmem:[#allocation2 + $0x30] sm:$0xff]
    %v39 = vld [vmem:[#allocation2 + $0x38] sm:$0xff]
    %v40 = vld [vmem:[#allocation2 + $0x40] sm:$0xff]
    %v41 = vld [vmem:[#allocation2 + $0x48] sm:$0xff]
    %v42 = vld [vmem:[#allocation2 + $0x50] sm:$0xff]
    %v43 = vld [vmem:[#allocation2 + $0x58] sm:$0xff]
    %v44 = vld [vmem:[#allocation2 + $0x60] sm:$0xff]
    %v45 = vld [vmem:[#allocation2 + $0x68] sm:$0xff]
    %v46 = vld [vmem:[#allocation2 + $0x70] sm:$0xff]
    %v47 = vld [vmem:[#allocation2 + $0x78] sm:$0xff]
    %v48 = vld [vmem:[%s2] sm:$0x1]
    %v50 = vperm.slane %v48, 0
    %52 = vmatpush.msra.mxu0 %v47
    %53 = vmatpush.msra.mxu0 %v46
    %54 = vmatpush.msra.mxu0 %v45
    %55 = vmatpush.msra.mxu0 %v44
    %56 = vmatpush.msra.mxu0 %v43
    %57 = vmatpush.msra.mxu0 %v42
    %58 = vmatpush.msra.mxu0 %v41
    %59 = vmatpush.msra.mxu0 %v40
    %60 = vmatpush.msra.mxu0 %v39
    %61 = vmatpush.msra.mxu0 %v38
    %62 = vmatpush.msra.mxu0 %v37
    %63 = vmatpush.msra.mxu0 %v36
    %64 = vmatpush.msra.mxu0 %v35
    %65 = vmatpush.msra.mxu0 %v34
    %66 = vmatpush.msra.mxu0 %v33
    %67 = vmatpush.msra.mxu0 %v32
    %68 = vmatmul.f32.gmra.mxu0 %v31
    %v69 = vpop.f32.mrf.mxu0
    %v70 = vadd.f32 %v50, %v69
    %71 = vdwg.mxu0
    %72 = vst [vmem:[#allocation5] sm:$0xff] %v70
    // Predicated region
    $region18: #{fc_forward.1} parent=1 // pred_check
      _
    $region19: #{fc_forward.1} parent=1 // pred_check_branch
      %74 = sbr.rel (0) target = $region21
    $region20: #{fc_forward.1} parent=1 // pred_region
      %76 = vsyncadd [#allocation4], 0
      %s78 = sshll.u32 [#allocation5], 4
      %s79 = int_to_ptr.vmem [resolvable:$true] %s78
      %s80 = sshll.u32 %s3, 4
      %s81 = int_to_ptr.hbm [resolvable:$true] %s80
      %83 = dma.vmem_to_hbm [thread:$0]  %s79, 128, %s81, [#allocation4]
    $region21: #{fc_forward.1} parent=1 // pred_fallthru
      _
    // Predicated region
    $region22: #{fc_forward.1} parent=1 // pred_check
      _
    $region23: #{fc_forward.1} parent=1 // pred_check_branch
      %85 = sbr.rel (0) target = $region25
    $region24: #{fc_forward.1} parent=1 // pred_region
      %87 = dma.done [#allocation4], 128
    $region25: #{fc_forward.1} parent=1 // pred_fallthru
      _
    %88 = vsyncpa [#allocation3], 1
    %89 = vsyncpa [#allocation4], 1

</llo_original>
